<compile_context>
chip_gen: v7x
topology: tpu7x:2x2x1
jax: 0.10.0
libtpu: 0.0.40
codegen_flags: <defaults>
</compile_context>

<pallas_src>
import functools

import jax
import jax.numpy as jnp
from jax.experimental import pallas as pl
from jax.experimental.pallas import tpu as pltpu

LANES = 128
SMALL_FALLBACK_ELEMS = 1 << 16   # < ~256 KiB f32: let XLA fuse the reduction.


def _cdiv(a, b):
    return -(-a // b)


def _round_up(a, b):
    return _cdiv(a, b) * b


def _largest_divisor_le(n, cap):
    for d in range(min(cap, n), 0, -1):
        if n % d == 0:
            return d
    return 1


def _device_tile_config():
    """(max_tile_rows, num_partials) per TPU generation."""
    try:
        kind = jax.devices()[0].device_kind.lower()
    except Exception:
        return 2048, 1
    if "v7" in kind:
        # 2 TCs/chip: shard row blocks across both cores.  4 MiB f32 blocks ->
        # 2 inputs x 2 buffers = 16 MiB per TC, under the 32 MiB scoped limit.
        return 8192, 2
    if "v6" in kind:
        return 8192, 1
    if "v5" in kind and ("lite" in kind or "v5e" in kind):
        # v5e scoped VMEM default is 16 MiB -> 2 MiB blocks (still ~85%+ of roofline).
        return 4096, 1
    return 2048, 1


def _sse_kernel(pd_ref, gd_ref, psum_ref, acc_ref, *,
                n_steps, tile_rows, rows_valid, lane_w,
                needs_mask, single_block):
    """Partial sum of (pred - gt)^2 over one chunk of row blocks.

    grid = (n_par, n_steps): axis 0 'parallel' (megacore split on v7x), axis 1
    'arbitrary' reduction over row blocks.  Each chunk writes its partial SSE
    to psum_ref[0, 0]; the wrapper sums the partials and divides by N.
    """
    if single_block:
        d = pd_ref[...].astype(jnp.float32) - gd_ref[...].astype(jnp.float32)
        psum_ref[0, 0] = jnp.sum(d * d)
        return

    c = pl.program_id(0)
    i = pl.program_id(1)

    @pl.when(i == 0)
    def _init():
        acc_ref[...] = jnp.zeros_like(acc_ref)

    # Hot path: cast + sub + mul + sublane-aligned adds (all VPU); the single
    # cross-lane reduce is deferred to the per-chunk finalize below.
    d = pd_ref[...].astype(jnp.float32) - gd_ref[...].astype(jnp.float32)
    sq = d * d

    if needs_mask:
        # `rem` = number of valid rows of this block (<= 0 for any clamped
        # duplicate block, which then contributes exactly zero).
        rem = rows_valid - (c * n_steps + i) * tile_rows

        @pl.when(rem >= tile_rows)
        def _full_block():
            acc_ref[...] += sq.reshape(-1, 8, lane_w).sum(axis=0)

        @pl.when(rem < tile_rows)
        def _partial_block():
            rows_idx = jax.lax.broadcasted_iota(jnp.int32, sq.shape, 0)
            masked = jnp.where(rows_idx < rem, sq, 0.0)
            acc_ref[...] += masked.reshape(-1, 8, lane_w).sum(axis=0)
    else:
        acc_ref[...] += sq.reshape(-1, 8, lane_w).sum(axis=0)

    @pl.when(i == n_steps - 1)
    def _finalize():
        psum_ref[0, 0] = jnp.sum(acc_ref[...])


def _sse_forward(pred_density, gt_density, max_tile_rows, num_partials,
                 small_fallback_elems):
    """sum((pred - gt)^2) over the density maps."""
    n = pred_density.size

    # Tiny maps: fixed pallas_call + per-step overhead dominates; XLA fuses
    # the small reduction for free.
    if small_fallback_elems and n < small_fallback_elems:
        d = (pred_density.astype(jnp.float32).reshape(-1)
             - gt_density.astype(jnp.float32).reshape(-1))
        return jnp.sum(d * d)

    dev_tile, dev_par = _device_tile_config()
    if max_tile_rows is None:
        max_tile_rows = dev_tile
    if num_partials is None:
        num_partials = dev_par

    # Copy-free 2D view (reshape of a contiguous array is a bitcast):
    #   * N % 128 == 0  ->  lane-dense [N/128, 128]
    #   * otherwise     ->  [N/d, d] with d = largest divisor <= 128
    #                       (block lane dim == full array dim is allowed)
    pd_flat = pred_density.reshape(-1)
    gd_flat = gt_density.reshape(-1)
    if n % LANES == 0:
        lane_w = LANES
    else:
        lane_w = _largest_divisor_le(n, LANES)
        if lane_w < 8:
            # Pathological size (no decent divisor): keep the zero-pad path.
            # This is the only case that still materializes a padded copy.
            pad = (-n) % LANES
            pd_flat = jnp.pad(pd_flat, (0, pad))
            gd_flat = jnp.pad(gd_flat, (0, pad))
            lane_w = LANES
    rows = pd_flat.size // lane_w
    pd2 = pd_flat.reshape(rows, lane_w)
    gd2 = gd_flat.reshape(rows, lane_w)

    if rows <= max_tile_rows:
        # One full-extent block (block dims == full array dims is allowed).
        tile_rows, n_par, n_steps = rows, 1, 1
        actual_blocks, total_blocks = 1, 1
        needs_mask, single_block = False, True
    else:
        n_par = max(1, min(num_partials, _cdiv(rows, 8)))
        n_steps = _cdiv(rows, n_par * max_tile_rows)
        total_blocks = n_par * n_steps
        # Snap tile_rows so the blocks distribute evenly over the chunks
        # (avoids the clamped duplicate-block DMA in the common case).
        tile_rows = min(max_tile_rows, _round_up(_cdiv(rows, total_blocks), 8))
        actual_blocks = _cdiv(rows, tile_rows)
        needs_mask = (total_blocks * tile_rows != rows)
        single_block = False

    clamp = actual_blocks < total_blocks
    last_block = actual_blocks - 1

    def index_map(c, i):
        gb = c * n_steps + i
        if clamp:
            gb = jnp.minimum(gb, last_block)   # never DMA past the last block
        return (gb, 0)

    kernel = functools.partial(
        _sse_kernel, n_steps=n_steps, tile_rows=tile_rows, rows_valid=rows,
        lane_w=lane_w, needs_mask=needs_mask, single_block=single_block)

    # In-flight footprint: 2 inputs x 2 pipeline buffers x one block (VMEM
    # pads lanes to 128), plus a one-vreg accumulator.
    elem_bytes = max(jnp.dtype(pd2.dtype).itemsize, jnp.dtype(gd2.dtype).itemsize)
    in_flight = 2 * 2 * tile_rows * LANES * elem_bytes
    vmem_limit = max(32 << 20, int(in_flight) + (8 << 20))

    # TODO(synk): optionally sweep pipeline_mode=pl.Buffered(3) on the input
    # specs and confirm in a profile that both v7x TensorCores take half the
    # row blocks; measure before committing.
    partials = pl.pallas_call(
        kernel,
        out_shape=jax.ShapeDtypeStruct((n_par, 1), jnp.float32),
        grid_spec=pltpu.PrefetchScalarGridSpec(
            num_scalar_prefetch=0,
            grid=(n_par, n_steps),
            in_specs=[
                pl.BlockSpec((tile_rows, lane_w), index_map),
                pl.BlockSpec((tile_rows, lane_w), index_map),
            ],
            out_specs=pl.BlockSpec((1, 1), lambda c, i: (c, 0),
                                   memory_space=pltpu.SMEM),
            scratch_shapes=[pltpu.VMEM((8, lane_w), jnp.float32)],
        ),
        compiler_params=pltpu.CompilerParams(
            dimension_semantics=("parallel", "arbitrary"),
            vmem_limit_bytes=vmem_limit),
    )(pd2, gd2)

    return jnp.sum(partials)


# --- differentiable wrapper: backward of the SSE is trivially 2*(pd-gd) -----
@functools.partial(jax.custom_vjp, nondiff_argnums=(2, 3, 4))
def _density_sse(pred_density, gt_density, max_tile_rows, num_partials,
                 small_fallback_elems):
    return _sse_forward(pred_density, gt_density, max_tile_rows, num_partials,
                        small_fallback_elems)


def _density_sse_fwd(pred_density, gt_density, max_tile_rows, num_partials,
                     small_fallback_elems):
    sse = _sse_forward(pred_density, gt_density, max_tile_rows, num_partials,
                       small_fallback_elems)
    return sse, (pred_density, gt_density)


def _density_sse_bwd(max_tile_rows, num_partials, small_fallback_elems, res, g):
    pred_density, gt_density = res
    diff = pred_density.astype(jnp.float32) - gt_density.astype(jnp.float32)
    gp = (2.0 * g) * diff
    return gp.astype(pred_density.dtype), (-gp).astype(gt_density.dtype)


_density_sse.defvjp(_density_sse_fwd, _density_sse_bwd)


def composition_loss(pred_density, gt_density, pred_count, gt_count,
                     lambda_density=1.0, lambda_count=1.0,
                     lambda_ssim=0.1, lambda_persp=0.5,
                     max_tile_rows=None, num_partials=None,
                     small_fallback_elems=SMALL_FALLBACK_ELEMS):
    n_density = pred_density.size

    sse = _density_sse(pred_density, gt_density, max_tile_rows, num_partials,
                       small_fallback_elems)
    mse = sse / jnp.float32(n_density)

    # Count L1 is over B elements: plain JAX (no point streaming tiny
    # sub-(8,128) blocks through the kernel).
    pc = jnp.asarray(pred_count, jnp.float32)
    gc = jnp.asarray(gt_count, jnp.float32)
    count_l1 = jnp.mean(jnp.abs(pc - gc))

    total = ((lambda_density + lambda_ssim + lambda_persp) * mse
             + lambda_count * count_l1)

    # TODO(synk): PyTorch returns .item() floats in the dict; kept as device
    # arrays so this can live inside a jitted/grad-ed train step.
    loss_dict = {
        'density_loss': mse,
        'count_loss': count_l1,
        'ssim_loss': mse,    # same MSE value as in the PyTorch module
        'persp_loss': mse,   # same MSE value as in the PyTorch module
        'total_loss': total,
    }
    return total, loss_dict


if __name__ == "__main__":
    key = jax.random.PRNGKey(0)
    k1, k2, k3, k4 = jax.random.split(key, 4)

    B, C, H, W = 2, 4, 16, 16
    pred_density = jax.random.uniform(k1, (B, C, H, W), jnp.float32)
    gt_density = jax.random.uniform(k2, (B, C, H, W), jnp.float32)
    pred_count = jax.random.uniform(k3, (B,), jnp.float32) * 100.0
    gt_count = jax.random.uniform(k4, (B,), jnp.float32) * 100.0

    def reference(pd, gd, pc, gc):
        mse = jnp.mean((pd.astype(jnp.float32) - gd.astype(jnp.float32)) ** 2)
        l1 = jnp.mean(jnp.abs(pc.astype(jnp.float32) - gc.astype(jnp.float32)))
        return (1.0 + 0.1 + 0.5) * mse + 1.0 * l1, mse, l1

    # Case 1: default config (tiny map -> plain-JAX fallback path).
    total, losses = composition_loss(pred_density, gt_density, pred_count, gt_count)
    total = jax.block_until_ready(total)
    t_ref, mse_ref, l1_ref = reference(pred_density, gt_density, pred_count, gt_count)
    assert jnp.allclose(total, t_ref, rtol=1e-5, atol=1e-5), (total, t_ref)
    assert jnp.allclose(losses['density_loss'], mse_ref, rtol=1e-5, atol=1e-5)
    assert jnp.allclose(losses['count_loss'], l1_ref, rtol=1e-5, atol=1e-5)

    # Case 2: force the Pallas kernel on the same map (single lane-dense block).
    total2, _ = composition_loss(pred_density, gt_density, pred_count, gt_count,
                                 small_fallback_elems=0)
    total2 = jax.block_until_ready(total2)
    assert jnp.allclose(total2, t_ref, rtol=1e-5, atol=1e-5), (total2, t_ref)

    # Case 3: element count (2*1*30*30 = 1800, not a multiple of 128) ->
    # copy-free lane-narrow path (lane width 120), kernel forced.
    pd_b = jax.random.uniform(k1, (2, 1, 30, 30), jnp.float32)
    gd_b = jax.random.uniform(k2, (2, 1, 30, 30), jnp.float32)
    total_b, _ = composition_loss(pd_b, gd_b, pred_count, gt_count,
                                  small_fallback_elems=0)
    total_b = jax.block_until_ready(total_b)
    t_b_ref, _, _ = reference(pd_b, gd_b, pred_count, gt_count)
    assert jnp.allclose(total_b, t_b_ref, rtol=1e-5, atol=1e-5), (total_b, t_b_ref)

    # Case 4: bf16 maps, small forced tiles -> multi-block streaming, two
    # parallel chunks, partial/clamped last block, in-kernel row masking.
    pd_c = jax.random.uniform(k1, (2, 3, 40, 40), jnp.float32).astype(jnp.bfloat16)
    gd_c = jax.random.uniform(k2, (2, 3, 40, 40), jnp.float32).astype(jnp.bfloat16)
    total_c, _ = composition_loss(pd_c, gd_c, pred_count, gt_count,
                                  small_fallback_elems=0,
                                  max_tile_rows=16, num_partials=2)
    total_c = jax.block_until_ready(total_c)
    t_c_ref, _, _ = reference(pd_c, gd_c, pred_count, gt_count)
    assert jnp.allclose(total_c, t_c_ref, rtol=1e-4, atol=1e-4), (total_c, t_c_ref)

    # Case 5: gradient through the kernel path (custom_vjp).
    grad_fn = jax.grad(lambda p: composition_loss(p, gt_density, pred_count,
                                                  gt_count,
                                                  small_fallback_elems=0)[0])
    g = jax.block_until_ready(grad_fn(pred_density))
    g_ref = (1.0 + 0.1 + 0.5) * 2.0 * (pred_density - gt_density) / pred_density.size
    assert jnp.allclose(g, g_ref, rtol=1e-5, atol=1e-6)

    print("KERNEL_OK")
</pallas_src>

<mosaic_0001>
module attributes {stable_mosaic.version = 11 : i64} {
  func.func @_sse_kernel(%arg0: i32, %arg1: i32, %arg2: memref<16x128xf32, #tpu.memory_space<vmem>>, %arg3: memref<16x128xf32, #tpu.memory_space<vmem>>, %arg4: memref<1x1xf32, #tpu.memory_space<smem>>, %arg5: memref<8x128xf32, #tpu.memory_space<vmem>>) attributes {dimension_semantics = [#tpu.dimension_semantics<parallel>, #tpu.dimension_semantics<arbitrary>], iteration_bounds = array<i64: 1, 1>, scalar_prefetch = 0 : i64, scratch_operands = 1 : i64, tpu.core_type = #tpu.core_type<tc>, window_params = [{transform_indices = @transform_0, window_bounds = array<i64: 16, 128>}, {transform_indices = @transform_1, window_bounds = array<i64: 16, 128>}, {transform_indices = @transform_2, window_bounds = array<i64: 1, 1>}]} {
    %c0 = arith.constant 0 : index
    %c0_0 = arith.constant 0 : index
    %0 = vector.load %arg2[%c0, %c0_0] : memref<16x128xf32, #tpu.memory_space<vmem>>, vector<16x128xf32>
    %c0_1 = arith.constant 0 : index
    %c0_2 = arith.constant 0 : index
    %1 = vector.load %arg3[%c0_1, %c0_2] : memref<16x128xf32, #tpu.memory_space<vmem>>, vector<16x128xf32>
    %2 = arith.subf %0, %1 : vector<16x128xf32>
    %3 = arith.mulf %2, %2 : vector<16x128xf32>
    %4 = vector.shape_cast %3 : vector<16x128xf32> to vector<1x16x128xf32>
    %cst = arith.constant dense<0.000000e+00> : vector<1xf32>
    %5 = vector.multi_reduction <add>, %4, %cst [1, 2] : vector<1x16x128xf32> to vector<1xf32>
    %6 = vector.shape_cast %5 : vector<1xf32> to vector<1x1x1xf32>
    %7 = vector.extract %6[0, 0, 0] : f32 from vector<1x1x1xf32>
    %c0_3 = arith.constant 0 : index
    %c0_4 = arith.constant 0 : index
    %8 = memref.load %arg4[%c0_3, %c0_4] : memref<1x1xf32, #tpu.memory_space<smem>>
    memref.store %7, %arg4[%c0_3, %c0_4] : memref<1x1xf32, #tpu.memory_space<smem>>
    return
  }
  func.func @transform_0(%arg0: i32, %arg1: i32) -> (i32, i32) {
    %c1_i32 = arith.constant 1 : i32
    %0 = arith.muli %arg0, %c1_i32 : i32
    %1 = arith.addi %0, %arg1 : i32
    %c0_i32 = arith.constant 0 : i32
    %c0_i32_0 = arith.constant 0 : i32
    return %1, %c0_i32 : i32, i32
  }
  func.func @transform_1(%arg0: i32, %arg1: i32) -> (i32, i32) {
    %c1_i32 = arith.constant 1 : i32
    %0 = arith.muli %arg0, %c1_i32 : i32
    %1 = arith.addi %0, %arg1 : i32
    %c0_i32 = arith.constant 0 : i32
    %c0_i32_0 = arith.constant 0 : i32
    return %1, %c0_i32 : i32, i32
  }
  func.func @transform_2(%arg0: i32, %arg1: i32) -> (i32, i32) {
    %c0_i32 = arith.constant 0 : i32
    %c0_i32_0 = arith.constant 0 : i32
    return %arg0, %c0_i32 : i32, i32
  }
}

</mosaic_0001>

<llo_original>
// kernel: tpu_custom_call.1
$region0: #{tpu_custom_call.1}
  #allocation0 [shape = 'u32[]', space=smem, size = 0x4, offset = 0x4, fixed_abs, tag = 'smem constant byte address 0x4 - core index']
  #allocation1 [shape = 'u32[144,128]{1,0:T(1,128)}', space=vmem, size = 0x12000, scoped, tag = 'internal scratch']
  #allocation2 [shape = 'f32[8,128]{1,0:T(8,128)}', space=vmem, size = 0x1000, scoped, tag = 'scratch operand']
  %s0 = inlined_call_operand.hbm [shape: f32[16,128], index: 0, kind: input, shape index: {}]
  %s1 = inlined_call_operand.hbm [shape: f32[16,128], index: 1, kind: input, shape index: {}]
  %s2 = inlined_call_operand.hbm [shape: f32[1,1], index: 2, kind: output, shape index: {}]
  %s3 = sld [smem:[#allocation0]]
  $region26: #{tpu_custom_call.1} parent=0
    _
  %s5 = ssub.s32 1, %s3
  %s6 = scalar_select 0, %s5, %s3
  $region1: #{tpu_custom_call.1} parent=0
    #allocation3 [shape = 'u8[8192]{0}', space=vmem, size = 0x2000, scoped, tag = 'input window, operand 0, single buffered']
    #allocation4 [shape = 's32[1]{0}', space=sflag, size = 0x4, scoped, tag = 'scoped memory for tpu_custom_call.1']
    #allocation5 [shape = 's32[1]{0}', space=sflag, size = 0x4, scoped, tag = 'scoped memory for tpu_custom_call.1']
    #allocation6 [shape = 'u8[8192]{0}', space=vmem, size = 0x2000, scoped, tag = 'input window, operand 1, single buffered']
    #allocation7 [shape = 's32[1]{0}', space=sflag, size = 0x4, scoped, tag = 'scoped memory for tpu_custom_call.1']
    #allocation8 [shape = 'u8[512]{0}', space=smem, size = 0x200, scoped, tag = 'output window, operand 0, single buffered']
    %7 = vsyncpa [#allocation4], 0
    %8 = vsyncpa [#allocation7], 0
    %9 = vsyncpa [#allocation5], 0
    // Predicated region
    $region2: #{tpu_custom_call.1} parent=1 // pred_check
      _
    $region3: #{tpu_custom_call.1} parent=1 // pred_check_branch
      %11 = sbr.rel (0) target = $region5
    $region4: #{tpu_custom_call.1} parent=1 // pred_region
      %s12 = sadd.s32 0, 0
      %s13 = smul.u32 2, %s12
      %s15 = ssub.s32 256, 256
      %16 = vsyncadd [#allocation4], %s15
      %s17 = smul.addr %s13, 128
      %s18 = scalar_lea.hbm %s0, %s17
      %s19 = sshll.u32 [#allocation3], 4
      %s20 = int_to_ptr.vmem [resolvable:$true] %s19
      %25 = dma.hbm_to_vmem [thread:$0]  %s18, 256, %s20, [#allocation4], 128, 128, 8
    $region5: #{tpu_custom_call.1} parent=1 // pred_fallthru
      _
    // Predicated region
    $region6: #{tpu_custom_call.1} parent=1 // pred_check
      _
    $region7: #{tpu_custom_call.1} parent=1 // pred_check_branch
      %27 = sbr.rel (0) target = $region9
    $region8: #{tpu_custom_call.1} parent=1 // pred_region
      %s28 = sadd.s32 0, 0
      %s29 = smul.u32 2, %s28
      %s31 = ssub.s32 256, 256
      %32 = vsyncadd [#allocation7], %s31
      %s33 = smul.addr %s29, 128
      %s34 = scalar_lea.hbm %s1, %s33
      %s35 = sshll.u32 [#allocation6], 4
      %s36 = int_to_ptr.vmem [resolvable:$true] %s35
      %41 = dma.hbm_to_vmem [thread:$0]  %s34, 256, %s36, [#allocation7], 128, 128, 8
    $region9: #{tpu_custom_call.1} parent=1 // pred_fallthru
      _
    // Predicated region
    $region10: #{tpu_custom_call.1} parent=1 // pred_check
      _
    $region11: #{tpu_custom_call.1} parent=1 // pred_check_branch
      %43 = sbr.rel (0) target = $region13
    $region12: #{tpu_custom_call.1} parent=1 // pred_region
      %44 = dma.done [#allocation4], 256
    $region13: #{tpu_custom_call.1} parent=1 // pred_fallthru
      _
    // Predicated region
    $region14: #{tpu_custom_call.1} parent=1 // pred_check
      _
    $region15: #{tpu_custom_call.1} parent=1 // pred_check_branch
      %46 = sbr.rel (0) target = $region17
    $region16: #{tpu_custom_call.1} parent=1 // pred_region
      %47 = dma.done [#allocation7], 256
    $region17: #{tpu_custom_call.1} parent=1 // pred_fallthru
      _
    %s48 = sadd.s32 0, 0
    %s49 = smul.u32 2, %s48
    %s50 = sadd.s32 0, 0
    %s51 = smul.u32 2, %s50
    %v52 = vld [vmem:[#allocation3] sm:$0xff]
    %v53 = vld [vmem:[#allocation3 + $0x8] sm:$0xff]
    %v54 = vld [vmem:[#allocation6] sm:$0xff]
    %v55 = vld [vmem:[#allocation6 + $0x8] sm:$0xff]
    %v56 = vsub.f32 %v52, %v54
    %v57 = vsub.f32 %v53, %v55
    %v58 = vmul.f32 %v56, %v56
    %v59 = vmul.f32 %v57, %v57
    %v60 = vadd.f32 %v58, %v59
    %61 = vadd.xlane.f32.xlu0 %v60
    %v62 = vpop.xlane.xlu0 %61
    %v63 = vrot.slane %v62, 4
    %v64 = vadd.f32 %v62, %v63
    %v65 = vrot.slane %v64, 2
    %v66 = vadd.f32 %v64, %v65
    %v67 = vrot.slane %v66, 1
    %v68 = vadd.f32 %v66, %v67
    %s69 = vtos %v68
    %s70 = scalar_lea.smem [#allocation8], 0
    %71 = sst [smem:[%s70]] %s69
    // Predicated region
    $region18: #{tpu_custom_call.1} parent=1 // pred_check
      _
    $region19: #{tpu_custom_call.1} parent=1 // pred_check_branch
      %73 = sbr.rel (0) target = $region21
    $region20: #{tpu_custom_call.1} parent=1 // pred_region
      %s75 = ssub.s32 16, 16
      %76 = vsyncadd [#allocation5], %s75
      %79 = dma.smem_to_hbm [#allocation8], 16, %s2, [#allocation5]
    $region21: #{tpu_custom_call.1} parent=1 // pred_fallthru
      _
    // Predicated region
    $region22: #{tpu_custom_call.1} parent=1 // pred_check
      _
    $region23: #{tpu_custom_call.1} parent=1 // pred_check_branch
      %81 = sbr.rel (0) target = $region25
    $region24: #{tpu_custom_call.1} parent=1 // pred_region
      %82 = dma.done [#allocation5], 16
    $region25: #{tpu_custom_call.1} parent=1 // pred_fallthru
      _
    %83 = sfence
    %84 = vsyncpa [#allocation4], 1
    %85 = vsyncpa [#allocation7], 1
    %86 = vsyncpa [#allocation5], 1

</llo_original>
